<compile_context>
chip_gen: v7x
topology: tpu7x:2x2x1
jax: 0.10.0
libtpu: 0.0.40
codegen_flags: <defaults>
</compile_context>

<pallas_src>
import numpy as np
import jax
import jax.numpy as jnp
from jax.experimental import pallas as pl
from jax.experimental.pallas import tpu as pltpu


def _bce_mcb_kernel(pred_ref, true_ref, neg_ref, tp_ref, possum_ref,
                    tp_acc, pos_acc):
    kk = pl.program_id(1)                    # spatial-tile index (reduction axis)

    x = pred_ref[...].astype(jnp.float32)    # (b, 1, ts, L) logits
    z = true_ref[...].astype(jnp.float32)    # (b, 1, ts, L) targets in {0, 1}

    # BCE-with-logits, numerically stable (same math as nn.BCEWithLogitsLoss):
    #   max(x, 0) - x*z + log1p(exp(-|x|))
    # TODO(synk): on v7x (3.2 TB/s HBM) this can flip EUP-bound (exp + log1p
    # per element); there is no exact single-transcendental softplus, revisit
    # only if the bundle dump shows the EUP slot binding.
    ce = jnp.maximum(x, 0.0) - x * z + jnp.log1p(jnp.exp(-jnp.abs(x)))

    # Per-pixel negative-class loss map, consumed by the top-k mining stage.
    neg_ref[...] = ((1.0 - z) * ce).astype(neg_ref.dtype)

    # Per-class scalar reductions: accumulate in tiny VMEM scratch across the
    # "arbitrary" spatial axis; write the resident (1,1,1) output block once.
    @pl.when(kk == 0)
    def _init():
        tp_acc[...] = jnp.zeros_like(tp_acc)
        pos_acc[...] = jnp.zeros_like(pos_acc)

    tp_acc[...] += jnp.sum(z)
    pos_acc[...] += jnp.sum(z * ce)

    @pl.when(kk == pl.num_programs(1) - 1)
    def _finalize():
        tp_ref[...] = tp_acc[...]
        possum_ref[...] = pos_acc[...]


def _pick_lane_dim(hw, max_lanes=512):
    """Largest multiple of 128 (<= max_lanes) that divides hw, else None."""
    best = None
    lanes = 128
    while lanes <= min(hw, max_lanes):
        if hw % lanes == 0:
            best = lanes
        lanes += 128
    return best


def _sublane_align(*dtypes):
    """Sublane alignment for the tile: 8 for f32, 16 for bf16, 32 for int8."""
    a = 8
    for dt in dtypes:
        a = max(a, 8 * max(1, 4 // np.dtype(dt).itemsize))
    return a


def _vmem_block_budget():
    """Generation-aware target bytes for one (pred + true + neg) block set.

    Keep one block set <= ~1/16 of reported VMEM so that 2x double-buffering
    of three streams plus internal scratch fits the scoped limit on every gen
    (v5e/v6e 128 MiB physical, v7x 64 MiB per TC)."""
    try:
        cap = getattr(pltpu.get_tpu_info(), "vmem_capacity_bytes", None)
        if cap:
            return int(min(8 << 20, max(2 << 20, cap // 16)))
    except Exception:
        pass
    return 4 << 20


def _pick_tile_s(s, per_row_bytes, align, target_bytes):
    """Largest tile over the grouped-spatial axis that divides s, is a multiple
    of `align` (or == s), and keeps one block set under target_bytes."""
    if s * per_row_bytes <= target_bytes or s <= align:
        return s
    ts = min(s, max(align, int(target_bytes // per_row_bytes)))
    ts = (ts // align) * align
    while ts >= align:
        if s % ts == 0:
            return ts
        ts -= align
    return s


def _run_bce_kernel(y_pred, y_true):
    b, c, h, w = y_true.shape
    hw = h * w

    # Lane-dense regrouping of the contiguous spatial dims (free reshape for
    # NCHW-contiguous arrays).  Fallback keeps the native (h, w) layout.
    lane = _pick_lane_dim(hw)
    if lane is None:
        s_dim, lane = h, w            # masked stores only in this fallback
    else:
        s_dim = hw // lane
    y_pred_r = y_pred.reshape(b, c, s_dim, lane)
    y_true_r = y_true.reshape(b, c, s_dim, lane)

    elem_bytes = y_pred.dtype.itemsize + y_true.dtype.itemsize + 4   # +f32 neg out
    per_row_bytes = b * lane * elem_bytes
    align = _sublane_align(y_pred.dtype, y_true.dtype, jnp.float32)
    ts = _pick_tile_s(s_dim, per_row_bytes, align, _vmem_block_budget())
    grid = (c, s_dim // ts)           # class axis "parallel" (v7x megacore; c>=2 keeps both TCs busy)

    block_set_bytes = b * ts * lane * elem_bytes
    vmem_limit = int(min(32 << 20, max(16 << 20, 4 * block_set_bytes)))

    data_block = (b, 1, ts, lane)
    data_map = lambda i, k: (0, i, k, 0)
    stat_map = lambda i, k: (i, 0, 0)

    numel = b * c * hw
    cost = pl.CostEstimate(
        flops=10 * numel,
        transcendentals=2 * numel,
        bytes_accessed=numel * elem_bytes + 2 * 4 * c,
    )

    neg, tp, pos_sum = pl.pallas_call(
        _bce_mcb_kernel,
        out_shape=(
            jax.ShapeDtypeStruct((b, c, s_dim, lane), jnp.float32),  # neg-loss map
            jax.ShapeDtypeStruct((c, 1, 1), jnp.float32),            # TP per class
            jax.ShapeDtypeStruct((c, 1, 1), jnp.float32),            # sum(pos_loss) per class
        ),
        grid=grid,
        in_specs=[
            pl.BlockSpec(data_block, data_map),
            pl.BlockSpec(data_block, data_map),
        ],
        out_specs=(
            pl.BlockSpec(data_block, data_map),
            pl.BlockSpec((1, 1, 1), stat_map),
            pl.BlockSpec((1, 1, 1), stat_map),
        ),
        scratch_shapes=[
            pltpu.VMEM((1, 1, 1), jnp.float32),   # TP accumulator
            pltpu.VMEM((1, 1, 1), jnp.float32),   # pos-loss accumulator
        ],
        compiler_params=pltpu.CompilerParams(
            dimension_semantics=("parallel", "arbitrary"),
            vmem_limit_bytes=vmem_limit),
        cost_estimate=cost,
    )(y_pred_r, y_true_r)
    return neg.reshape(b, c, hw), tp[:, 0, 0], pos_sum[:, 0, 0]


def multilabel_soft_bce_loss(y_pred, y_true, *, smooth=0.0, weighted=True,
                             mcb=True, hp_lambda=10, epsilon=1e-6):
    """Forward pass of MultiLabelSoftBinaryCrossEntropy (default configuration).

    Fully jittable: no host syncs; the data-dependent top-k is realized as a
    batched descending sort + prefix-sum gather with the dynamic per-class k.
    """
    # TODO(synk): smooth>0 (torch.rand_like target jitter), weighted=False and
    # mcb=False reduction branches are not wired up; only the module's default
    # configuration (smooth=0, weighted=True, mcb=True, from_logits=True) is
    # implemented here.
    assert smooth == 0.0 and weighted and mcb, "only the default config is implemented"

    b, c, h, w = y_true.shape
    hw = h * w
    n = b * hw

    neg_rows, tp, pos_sum = _run_bce_kernel(y_pred, y_true)   # (b,c,hw), (c,), (c,)

    # ---- MCB hard-negative mining (device-side, jit/grad friendly) ----
    # TODO(synk): for large h*w replace the full per-row sort with a
    # histogram/threshold top-k-sum to avoid the O(hw log hw) sort and its
    # extra HBM round trips of the f32 neg map.
    sorted_desc = -jnp.sort(-neg_rows, axis=-1)      # (b, c, hw), descending
    csum = jnp.cumsum(sorted_desc, axis=-1)          # per-row prefix sums

    lam = jnp.float32(hp_lambda)
    tn = jnp.float32(n) - tp
    k_f = jnp.maximum(jnp.minimum(tp * lam, tn) / b, lam)
    k_f = jnp.minimum(k_f, jnp.float32(hw))          # k can never exceed a row
    k_i = jnp.maximum(k_f.astype(jnp.int32), 1)      # == int(topk) truncation; guard k>=1
    k_flt = k_i.astype(jnp.float32)

    # Sum of the first k sorted values per row == csum[..., k-1]; gather it
    # instead of materializing a (b, c, hw) mask and reducing it.
    idx = jnp.broadcast_to((k_i - 1).reshape(1, c, 1), (b, c, 1))
    topk_sum = jnp.sum(jnp.take_along_axis(csum, idx, axis=-1)[..., 0], axis=0)   # (c,)

    beta_k = k_flt / (tp / b + k_flt)
    mean_topk = topk_sum / (b * k_flt)
    mcb_loss = jnp.sum(mean_topk * (1.0 - beta_k) + beta_k * pos_sum / (tp + epsilon))
    return mcb_loss


def _reference_loss(y_pred, y_true, hp_lambda=10, eps=1e-6):
    """Pure-NumPy replica of the PyTorch forward (default config) for checking."""
    yp = np.asarray(y_pred).astype(np.float64)
    yt = np.asarray(y_true).astype(np.float64)
    b, c, h, w = yt.shape
    ce = np.maximum(yp, 0.0) - yp * yt + np.log1p(np.exp(-np.abs(yp)))
    total = 0.0
    for i in range(c):
        TP = yt[:, i].sum()
        cl = ce[:, i]
        pos = yt[:, i] * cl
        neg = ((1.0 - yt[:, i]) * cl).reshape(b, h * w)
        TN = b * h * w - TP
        k = int(max(min(TP * hp_lambda, TN) / b, float(hp_lambda)))
        k = min(k, h * w)
        ik = -np.sort(-neg, axis=1)[:, :k]
        beta_k = k / (TP / b + k)
        total += (ik * (1.0 - beta_k)).mean()
        total += beta_k * pos.sum() / (TP + eps)
    return float(total)


if __name__ == "__main__":
    key = jax.random.PRNGKey(0)
    kp, kt = jax.random.split(key)
    b, c, h, w = 2, 4, 16, 16
    y_pred = jax.random.normal(kp, (b, c, h, w), dtype=jnp.float32)          # logits
    # Targets kept narrow (bf16 holds {0,1} exactly); the kernel casts to f32.
    y_true = (jax.random.uniform(kt, (b, c, h, w)) < 0.3).astype(jnp.bfloat16)

    loss_fn = jax.jit(multilabel_soft_bce_loss)
    loss = jax.block_until_ready(loss_fn(y_pred, y_true))

    ref = _reference_loss(np.asarray(y_pred),
                          np.asarray(y_true).astype(np.float32))
    assert np.allclose(float(loss), ref, rtol=1e-4, atol=1e-5), (float(loss), ref)
    print("KERNEL_OK")
</pallas_src>

<mosaic_0001>
module attributes {stable_mosaic.version = 11 : i64} {
  func.func @_bce_mcb_kernel(%arg0: i32, %arg1: i32, %arg2: memref<2x1x1x256xf32, #tpu.memory_space<vmem>>, %arg3: memref<2x1x1x256xbf16, #tpu.memory_space<vmem>>, %arg4: memref<2x1x1x256xf32, #tpu.memory_space<vmem>>, %arg5: memref<1x1x1xf32, #tpu.memory_space<vmem>>, %arg6: memref<1x1x1xf32, #tpu.memory_space<vmem>>, %arg7: memref<1x1x1xf32, #tpu.memory_space<vmem>>, %arg8: memref<1x1x1xf32, #tpu.memory_space<vmem>>) attributes {dimension_semantics = [#tpu.dimension_semantics<parallel>, #tpu.dimension_semantics<arbitrary>], iteration_bounds = array<i64: 4, 1>, scalar_prefetch = 0 : i64, scratch_operands = 2 : i64, tpu.core_type = #tpu.core_type<tc>, window_params = [{transform_indices = @transform_0, window_bounds = array<i64: 2, 1, 1, 256>}, {transform_indices = @transform_1, window_bounds = array<i64: 2, 1, 1, 256>}, {transform_indices = @transform_2, window_bounds = array<i64: 2, 1, 1, 256>}, {transform_indices = @transform_3, window_bounds = array<i64: 1, 1, 1>}, {transform_indices = @transform_4, window_bounds = array<i64: 1, 1, 1>}]} {
    %c0 = arith.constant 0 : index
    %c0_0 = arith.constant 0 : index
    %c0_1 = arith.constant 0 : index
    %c0_2 = arith.constant 0 : index
    %0 = vector.load %arg2[%c0, %c0_0, %c0_1, %c0_2] : memref<2x1x1x256xf32, #tpu.memory_space<vmem>>, vector<2x1x1x256xf32>
    %c0_3 = arith.constant 0 : index
    %c0_4 = arith.constant 0 : index
    %c0_5 = arith.constant 0 : index
    %c0_6 = arith.constant 0 : index
    %1 = vector.load %arg3[%c0_3, %c0_4, %c0_5, %c0_6] : memref<2x1x1x256xbf16, #tpu.memory_space<vmem>>, vector<2x1x1x256xbf16>
    %2 = arith.extf %1 : vector<2x1x1x256xbf16> to vector<2x1x1x256xf32>
    %cst = arith.constant 0.000000e+00 : f32
    %3 = vector.broadcast %cst : f32 to vector<2x1x1x256xf32>
    %4 = arith.maximumf %0, %3 : vector<2x1x1x256xf32>
    %5 = arith.mulf %0, %2 : vector<2x1x1x256xf32>
    %6 = arith.subf %4, %5 : vector<2x1x1x256xf32>
    %7 = math.absf %0 : vector<2x1x1x256xf32>
    %cst_7 = arith.constant 0.000000e+00 : f32
    %8 = vector.broadcast %cst_7 : f32 to vector<2x1x1x256xf32>
    %9 = arith.subf %8, %7 : vector<2x1x1x256xf32>
    %10 = math.exp %9 : vector<2x1x1x256xf32>
    %11 = math.log1p %10 : vector<2x1x1x256xf32>
    %12 = arith.addf %6, %11 : vector<2x1x1x256xf32>
    %cst_8 = arith.constant 1.000000e+00 : f32
    %13 = vector.broadcast %cst_8 : f32 to vector<2x1x1x256xf32>
    %14 = arith.subf %13, %2 : vector<2x1x1x256xf32>
    %15 = arith.mulf %14, %12 : vector<2x1x1x256xf32>
    %c0_9 = arith.constant 0 : index
    %c0_10 = arith.constant 0 : index
    %c0_11 = arith.constant 0 : index
    %c0_12 = arith.constant 0 : index
    %16 = vector.load %arg4[%c0_9, %c0_10, %c0_11, %c0_12] : memref<2x1x1x256xf32, #tpu.memory_space<vmem>>, vector<2x1x1x256xf32>
    tpu.vector_store %arg4[%c0_9, %c0_10, %c0_11, %c0_12], %15 {strides = array<i32>} : memref<2x1x1x256xf32, #tpu.memory_space<vmem>>, vector<2x1x1x256xf32>,
    %c0_i32 = arith.constant 0 : i32
    %17 = arith.cmpi eq, %arg1, %c0_i32 : i32
    %18 = arith.extui %17 : i1 to i32
    %c0_i32_13 = arith.constant 0 : i32
    %19 = arith.cmpi ne, %18, %c0_i32_13 : i32
    scf.if %19 {
      %cst_30 = arith.constant 0.000000e+00 : f32
      %40 = vector.broadcast %cst_30 : f32 to vector<1x1x1xf32>
      %c0_31 = arith.constant 0 : index
      %c0_32 = arith.constant 0 : index
      %c0_33 = arith.constant 0 : index
      %41 = vector.load %arg7[%c0_31, %c0_32, %c0_33] : memref<1x1x1xf32, #tpu.memory_space<vmem>>, vector<1x1x1xf32>
      tpu.vector_store %arg7[%c0_31, %c0_32, %c0_33], %40 {strides = array<i32>} : memref<1x1x1xf32, #tpu.memory_space<vmem>>, vector<1x1x1xf32>,
      %cst_34 = arith.constant 0.000000e+00 : f32
      %42 = vector.broadcast %cst_34 : f32 to vector<1x1x1xf32>
      %c0_35 = arith.constant 0 : index
      %c0_36 = arith.constant 0 : index
      %c0_37 = arith.constant 0 : index
      %43 = vector.load %arg8[%c0_35, %c0_36, %c0_37] : memref<1x1x1xf32, #tpu.memory_space<vmem>>, vector<1x1x1xf32>
      tpu.vector_store %arg8[%c0_35, %c0_36, %c0_37], %42 {strides = array<i32>} : memref<1x1x1xf32, #tpu.memory_space<vmem>>, vector<1x1x1xf32>,
    } else {
    }
    %c0_14 = arith.constant 0 : index
    %c0_15 = arith.constant 0 : index
    %c0_16 = arith.constant 0 : index
    %20 = vector.load %arg7[%c0_14, %c0_15, %c0_16] : memref<1x1x1xf32, #tpu.memory_space<vmem>>, vector<1x1x1xf32>
    %21 = vector.shape_cast %2 : vector<2x1x1x256xf32> to vector<1x2x1x1x256xf32>
    %cst_17 = arith.constant dense<0.000000e+00> : vector<1xf32>
    %22 = vector.multi_reduction <add>, %21, %cst_17 [1, 2, 3, 4] : vector<1x2x1x1x256xf32> to vector<1xf32>
    %23 = vector.shape_cast %22 : vector<1xf32> to vector<1x1x1x1x1xf32>
    %24 = vector.extract %23[0, 0, 0, 0, 0] : f32 from vector<1x1x1x1x1xf32>
    %25 = vector.broadcast %24 : f32 to vector<1x1x1xf32>
    %26 = arith.addf %20, %25 : vector<1x1x1xf32>
    %c0_18 = arith.constant 0 : index
    %c0_19 = arith.constant 0 : index
    %c0_20 = arith.constant 0 : index
    %27 = vector.load %arg7[%c0_18, %c0_19, %c0_20] : memref<1x1x1xf32, #tpu.memory_space<vmem>>, vector<1x1x1xf32>
    tpu.vector_store %arg7[%c0_18, %c0_19, %c0_20], %26 {strides = array<i32>} : memref<1x1x1xf32, #tpu.memory_space<vmem>>, vector<1x1x1xf32>,
    %c0_21 = arith.constant 0 : index
    %c0_22 = arith.constant 0 : index
    %c0_23 = arith.constant 0 : index
    %28 = vector.load %arg8[%c0_21, %c0_22, %c0_23] : memref<1x1x1xf32, #tpu.memory_space<vmem>>, vector<1x1x1xf32>
    %29 = arith.mulf %2, %12 : vector<2x1x1x256xf32>
    %30 = vector.shape_cast %29 : vector<2x1x1x256xf32> to vector<1x2x1x1x256xf32>
    %cst_24 = arith.constant dense<0.000000e+00> : vector<1xf32>
    %31 = vector.multi_reduction <add>, %30, %cst_24 [1, 2, 3, 4] : vector<1x2x1x1x256xf32> to vector<1xf32>
    %32 = vector.shape_cast %31 : vector<1xf32> to vector<1x1x1x1x1xf32>
    %33 = vector.extract %32[0, 0, 0, 0, 0] : f32 from vector<1x1x1x1x1xf32>
    %34 = vector.broadcast %33 : f32 to vector<1x1x1xf32>
    %35 = arith.addf %28, %34 : vector<1x1x1xf32>
    %c0_25 = arith.constant 0 : index
    %c0_26 = arith.constant 0 : index
    %c0_27 = arith.constant 0 : index
    %36 = vector.load %arg8[%c0_25, %c0_26, %c0_27] : memref<1x1x1xf32, #tpu.memory_space<vmem>>, vector<1x1x1xf32>
    tpu.vector_store %arg8[%c0_25, %c0_26, %c0_27], %35 {strides = array<i32>} : memref<1x1x1xf32, #tpu.memory_space<vmem>>, vector<1x1x1xf32>,
    %c0_i32_28 = arith.constant 0 : i32
    %37 = arith.cmpi eq, %arg1, %c0_i32_28 : i32
    %38 = arith.extui %37 : i1 to i32
    %c0_i32_29 = arith.constant 0 : i32
    %39 = arith.cmpi ne, %38, %c0_i32_29 : i32
    scf.if %39 {
      %c0_30 = arith.constant 0 : index
      %c0_31 = arith.constant 0 : index
      %c0_32 = arith.constant 0 : index
      %40 = vector.load %arg7[%c0_30, %c0_31, %c0_32] : memref<1x1x1xf32, #tpu.memory_space<vmem>>, vector<1x1x1xf32>
      %c0_33 = arith.constant 0 : index
      %c0_34 = arith.constant 0 : index
      %c0_35 = arith.constant 0 : index
      %41 = vector.load %arg5[%c0_33, %c0_34, %c0_35] : memref<1x1x1xf32, #tpu.memory_space<vmem>>, vector<1x1x1xf32>
      tpu.vector_store %arg5[%c0_33, %c0_34, %c0_35], %40 {strides = array<i32>} : memref<1x1x1xf32, #tpu.memory_space<vmem>>, vector<1x1x1xf32>,
      %c0_36 = arith.constant 0 : index
      %c0_37 = arith.constant 0 : index
      %c0_38 = arith.constant 0 : index
      %42 = vector.load %arg8[%c0_36, %c0_37, %c0_38] : memref<1x1x1xf32, #tpu.memory_space<vmem>>, vector<1x1x1xf32>
      %c0_39 = arith.constant 0 : index
      %c0_40 = arith.constant 0 : index
      %c0_41 = arith.constant 0 : index
      %43 = vector.load %arg6[%c0_39, %c0_40, %c0_41] : memref<1x1x1xf32, #tpu.memory_space<vmem>>, vector<1x1x1xf32>
      tpu.vector_store %arg6[%c0_39, %c0_40, %c0_41], %42 {strides = array<i32>} : memref<1x1x1xf32, #tpu.memory_space<vmem>>, vector<1x1x1xf32>,
    } else {
    }
    return
  }
  func.func @transform_0(%arg0: i32, %arg1: i32) -> (i32, i32, i32, i32) {
    %c0_i32 = arith.constant 0 : i32
    %c0_i32_0 = arith.constant 0 : i32
    %c0_i32_1 = arith.constant 0 : i32
    return %c0_i32, %arg0, %arg1, %c0_i32_0 : i32, i32, i32, i32
  }
  func.func @transform_1(%arg0: i32, %arg1: i32) -> (i32, i32, i32, i32) {
    %c0_i32 = arith.constant 0 : i32
    %c0_i32_0 = arith.constant 0 : i32
    %c0_i32_1 = arith.constant 0 : i32
    return %c0_i32, %arg0, %arg1, %c0_i32_0 : i32, i32, i32, i32
  }
  func.func @transform_2(%arg0: i32, %arg1: i32) -> (i32, i32, i32, i32) {
    %c0_i32 = arith.constant 0 : i32
    %c0_i32_0 = arith.constant 0 : i32
    %c0_i32_1 = arith.constant 0 : i32
    return %c0_i32, %arg0, %arg1, %c0_i32_0 : i32, i32, i32, i32
  }
  func.func @transform_3(%arg0: i32, %arg1: i32) -> (i32, i32, i32) {
    %c0_i32 = arith.constant 0 : i32
    %c0_i32_0 = arith.constant 0 : i32
    %c0_i32_1 = arith.constant 0 : i32
    return %arg0, %c0_i32, %c0_i32_0 : i32, i32, i32
  }
  func.func @transform_4(%arg0: i32, %arg1: i32) -> (i32, i32, i32) {
    %c0_i32 = arith.constant 0 : i32
    %c0_i32_0 = arith.constant 0 : i32
    %c0_i32_1 = arith.constant 0 : i32
    return %arg0, %c0_i32, %c0_i32_0 : i32, i32, i32
  }
}

</mosaic_0001>

<llo_original>
// kernel: neg.0
$region0: #{neg.0}
  #allocation0 [shape = 's32[1]{0}', space=sflag, size = 0x4, scoped, tag = 'scoped memory for neg.0']
  %s0 = inlined_call_operand.vmem [shape: f32[2,4,1,256], index: 0, kind: input, shape index: {}]
  %s1 = inlined_call_operand.vmem [shape: f32[2,4,1,256], index: 1, kind: output, shape index: {}]
  %v2 = vld [vmem:[%s0] sm:$0x1]
  %3 = xla_tuple %v2
  %4 = xla_tuple %3
  %v5 = vxor.u32 %v2, 2147483648
  %6 = xla_tuple %v5
  %7 = vst [vmem:[%s1] sm:$0x1] %v5
  %s8 = scalar_lea.vmem %s0, 8
  %v9 = vld [vmem:[%s8] sm:$0x1]
  %10 = xla_tuple %v9
  %11 = xla_tuple %10
  %v12 = vxor.u32 %v9, 2147483648
  %13 = xla_tuple %v12
  %s14 = scalar_lea.vmem %s1, 8
  %15 = vst [vmem:[%s14] sm:$0x1] %v12
  %s16 = scalar_lea.vmem %s0, 2
  %v17 = vld [vmem:[%s16] sm:$0x1]
  %18 = xla_tuple %v17
  %19 = xla_tuple %18
  %v20 = vxor.u32 %v17, 2147483648
  %21 = xla_tuple %v20
  %s22 = scalar_lea.vmem %s1, 2
  %23 = vst [vmem:[%s22] sm:$0x1] %v20
  %s24 = scalar_lea.vmem %s0, 10
  %v25 = vld [vmem:[%s24] sm:$0x1]
  %26 = xla_tuple %v25
  %27 = xla_tuple %26
  %v28 = vxor.u32 %v25, 2147483648
  %29 = xla_tuple %v28
  %s30 = scalar_lea.vmem %s1, 10
  %31 = vst [vmem:[%s30] sm:$0x1] %v28
  %s32 = scalar_lea.vmem %s0, 4
  %v33 = vld [vmem:[%s32] sm:$0x1]
  %34 = xla_tuple %v33
  %35 = xla_tuple %34
  %v36 = vxor.u32 %v33, 2147483648
  %37 = xla_tuple %v36
  %s38 = scalar_lea.vmem %s1, 4
  %39 = vst [vmem:[%s38] sm:$0x1] %v36
  %s40 = scalar_lea.vmem %s0, 12
  %v41 = vld [vmem:[%s40] sm:$0x1]
  %42 = xla_tuple %v41
  %43 = xla_tuple %42
  %v44 = vxor.u32 %v41, 2147483648
  %45 = xla_tuple %v44
  %s46 = scalar_lea.vmem %s1, 12
  %47 = vst [vmem:[%s46] sm:$0x1] %v44
  %s48 = scalar_lea.vmem %s0, 6
  %v49 = vld [vmem:[%s48] sm:$0x1]
  %50 = xla_tuple %v49
  %51 = xla_tuple %50
  %v52 = vxor.u32 %v49, 2147483648
  %53 = xla_tuple %v52
  %s54 = scalar_lea.vmem %s1, 6
  %55 = vst [vmem:[%s54] sm:$0x1] %v52
  %s56 = scalar_lea.vmem %s0, 14
  %v57 = vld [vmem:[%s56] sm:$0x1]
  %58 = xla_tuple %v57
  %59 = xla_tuple %58
  %v60 = vxor.u32 %v57, 2147483648
  %61 = xla_tuple %v60
  %s62 = scalar_lea.vmem %s1, 14
  %63 = vst [vmem:[%s62] sm:$0x1] %v60
  %s64 = scalar_lea.vmem %s0, 1
  %v65 = vld [vmem:[%s64] sm:$0x1]
  %66 = xla_tuple %v65
  %67 = xla_tuple %66
  %v68 = vxor.u32 %v65, 2147483648
  %69 = xla_tuple %v68
  %s70 = scalar_lea.vmem %s1, 1
  %71 = vst [vmem:[%s70] sm:$0x1] %v68
  %s72 = scalar_lea.vmem %s0, 9
  %v73 = vld [vmem:[%s72] sm:$0x1]
  %74 = xla_tuple %v73
  %75 = xla_tuple %74
  %v76 = vxor.u32 %v73, 2147483648
  %77 = xla_tuple %v76
  %s78 = scalar_lea.vmem %s1, 9
  %79 = vst [vmem:[%s78] sm:$0x1] %v76
  %s80 = scalar_lea.vmem %s0, 3
  %v81 = vld [vmem:[%s80] sm:$0x1]
  %82 = xla_tuple %v81
  %83 = xla_tuple %82
  %v84 = vxor.u32 %v81, 2147483648
  %85 = xla_tuple %v84
  %s86 = scalar_lea.vmem %s1, 3
  %87 = vst [vmem:[%s86] sm:$0x1] %v84
  %s88 = scalar_lea.vmem %s0, 11
  %v89 = vld [vmem:[%s88] sm:$0x1]
  %90 = xla_tuple %v89
  %91 = xla_tuple %90
  %v92 = vxor.u32 %v89, 2147483648
  %93 = xla_tuple %v92
  %s94 = scalar_lea.vmem %s1, 11
  %95 = vst [vmem:[%s94] sm:$0x1] %v92
  %s96 = scalar_lea.vmem %s0, 5
  %v97 = vld [vmem:[%s96] sm:$0x1]
  %98 = xla_tuple %v97
  %99 = xla_tuple %98
  %v100 = vxor.u32 %v97, 2147483648
  %101 = xla_tuple %v100
  %s102 = scalar_lea.vmem %s1, 5
  %103 = vst [vmem:[%s102] sm:$0x1] %v100
  %s104 = scalar_lea.vmem %s0, 13
  %v105 = vld [vmem:[%s104] sm:$0x1]
  %106 = xla_tuple %v105
  %107 = xla_tuple %106
  %v108 = vxor.u32 %v105, 2147483648
  %109 = xla_tuple %v108
  %s110 = scalar_lea.vmem %s1, 13
  %111 = vst [vmem:[%s110] sm:$0x1] %v108
  %s112 = scalar_lea.vmem %s0, 7
  %v113 = vld [vmem:[%s112] sm:$0x1]
  %114 = xla_tuple %v113
  %115 = xla_tuple %114
  %v116 = vxor.u32 %v113, 2147483648
  %117 = xla_tuple %v116
  %s118 = scalar_lea.vmem %s1, 7
  %119 = vst [vmem:[%s118] sm:$0x1] %v116
  %s120 = scalar_lea.vmem %s0, 15
  %v121 = vld [vmem:[%s120] sm:$0x1]
  %122 = xla_tuple %v121
  %123 = xla_tuple %122
  %v124 = vxor.u32 %v121, 2147483648
  %125 = xla_tuple %v124
  %s126 = scalar_lea.vmem %s1, 15
  %127 = vst [vmem:[%s126] sm:$0x1] %v124

// kernel: neg.3
$region0: #{neg.3}
  #allocation0 [shape = 's32[1]{0}', space=sflag, size = 0x4, scoped, tag = 'scoped memory for neg.3']
  %s0 = inlined_call_operand.vmem [shape: f32[2,4,256], index: 0, kind: input, shape index: {}]
  %s1 = inlined_call_operand.vmem [shape: f32[2,4,256], index: 1, kind: output, shape index: {}]
  %v2 = vld [vmem:[%s0] sm:$0xf]
  %3 = xla_tuple %v2
  %4 = xla_tuple %3
  %v5 = vxor.u32 %v2, 2147483648
  %6 = xla_tuple %v5
  %7 = vst [vmem:[%s1] sm:$0xf] %v5
  %s8 = scalar_lea.vmem %s0, 8
  %v9 = vld [vmem:[%s8] sm:$0xf]
  %10 = xla_tuple %v9
  %11 = xla_tuple %10
  %v12 = vxor.u32 %v9, 2147483648
  %13 = xla_tuple %v12
  %s14 = scalar_lea.vmem %s1, 8
  %15 = vst [vmem:[%s14] sm:$0xf] %v12
  %s16 = scalar_lea.vmem %s0, 4
  %v17 = vld [vmem:[%s16] sm:$0xf]
  %18 = xla_tuple %v17
  %19 = xla_tuple %18
  %v20 = vxor.u32 %v17, 2147483648
  %21 = xla_tuple %v20
  %s22 = scalar_lea.vmem %s1, 4
  %23 = vst [vmem:[%s22] sm:$0xf] %v20
  %s24 = scalar_lea.vmem %s0, 12
  %v25 = vld [vmem:[%s24] sm:$0xf]
  %26 = xla_tuple %v25
  %27 = xla_tuple %26
  %v28 = vxor.u32 %v25, 2147483648
  %29 = xla_tuple %v28
  %s30 = scalar_lea.vmem %s1, 12
  %31 = vst [vmem:[%s30] sm:$0xf] %v28

// kernel: multilabel_soft_bce_loss.1
$region0: #{multilabel_soft_bce_loss.1}
  #allocation0 [shape = 'u32[]', space=smem, size = 0x4, offset = 0x4, fixed_abs, tag = 'smem constant byte address 0x4 - core index']
  #allocation1 [shape = 'u32[144,128]{1,0:T(1,128)}', space=vmem, size = 0x12000, scoped, tag = 'internal scratch']
  #allocation2 [shape = 'f32[1,1,1]{2,1,0:T(1,128)}', space=vmem, size = 0x200, scoped, tag = 'scratch operand']
  #allocation3 [shape = 'f32[1,1,1]{2,1,0:T(1,128)}', space=vmem, size = 0x200, scoped, tag = 'scratch operand']
  %s0 = inlined_call_operand.vmem [shape: f32[2,4,1,256], index: 0, kind: input, shape index: {}]
  %s1 = inlined_call_operand.vmem [shape: bf16[2,4,1,256], index: 1, kind: input, shape index: {}]
  %s2 = inlined_call_operand.vmem [shape: f32[2,4,1,256], index: 2, kind: output, shape index: {0}]
  %s3 = inlined_call_operand.vmem [shape: f32[4,1,1], index: 3, kind: output, shape index: {1}]
  %s4 = inlined_call_operand.vmem [shape: f32[4,1,1], index: 4, kind: output, shape index: {2}]
  %5 = xla_tuple %s2, %s3, %s4
  %s6 = sld [smem:[#allocation0]]
  $region163: #{multilabel_soft_bce_loss.1} parent=0
    _
  %s8 = ssub.s32 1, %s6
  %s9 = scalar_select 0, %s8, %s6
  $region1: #{multilabel_soft_bce_loss.1} parent=0
    #allocation4 [shape = 'u8[4096]{0}', space=vmem, size = 0x1000, scoped, tag = 'input window, operand 0']
    #allocation5 [shape = 'u8[4096]{0}', space=vmem, size = 0x1000, scoped, tag = 'input window, operand 1']
    #allocation6 [shape = 'u8[4096]{0}', space=vmem, size = 0x1000, scoped, tag = 'output window, operand 0']
    loop: start=0, step=1, limit=6
    $region2: #{multilabel_soft_bce_loss.1} parent=1 // loop_pre_header
      _
    $region3: #{multilabel_soft_bce_loss.1} parent=1 // loop_header
      %s11 = sphi 0, %s15
      %p12 = scmp.ge.s32.totalorder %s11, 6
      %s18 = sphi 0, %s30
      %s19 = sphi 0, %s26
      %s20 = sphi 0, %s18
      %s21 = sphi 0, %s19
      %s22 = sphi 0, %s20
      %s23 = sphi 0, %s21
      %s35 = sphi 0, %s37
      %s38 = sphi 0, %s35
      %s39 = sphi 0, %s38
      %s55 = sphi 0, %s39
      %s63 = sphi 0, %s65
      %s66 = sphi 0, %s63
      %s67 = sphi 0, %s66
      %s83 = sphi 0, %s67
      %s91 = sphi 0, %s93
      %s94 = sphi 0, %s91
      %s95 = sphi 0, %s94
      %s111 = sphi 0, %s95
      %s117 = sphi 0, %s119
      %s120 = sphi 0, %s117
      %s121 = sphi 0, %s120
      %s137 = sphi 0, %s121
      %s143 = sphi 0, %s145
      %s146 = sphi 0, %s143
      %s147 = sphi 0, %s146
      %s163 = sphi 0, %s147
    $region4: #{multilabel_soft_bce_loss.1} parent=1 // loop_header_branch
      %14 = sbr.rel (%p12) target = $region8
    $region5: #{multilabel_soft_bce_loss.1} parent=1 // loop_body
      %s16 = ssub.s32 %s11, 1
      %s17 = ssub.s32 %s11, 2
      %s24 = sadd.s32 1, %s19
      %p25 = scmp.ge.s32.totalorder %s24, 1
      %s26 = scalar_select %p25, 0, %s24
      %s27 = sadd.s32 1, %s18
      %s28 = scalar_select %p25, %s27, %s18
      %p29 = scmp.ge.s32.totalorder %s28, 4
      %s30 = scalar_select %p29, 0, %s28
      %s31 = ssub.s32 %s18, %s30
      %s32 = ssub.s32 %s19, %s26
      %s33 = sor.u32 %s31, %s32
      %p34 = scmp.eq.s32.totalorder %s33, 0
      %s36 = sadd.s32 %s35, 1
      %s37 = scalar_select %p34, %s35, %s36
      %p40 = pneg %p34
      %p41 = scmp.eq.s32.totalorder %s11, 3
      %p42 = por %p40, %p41
      %p43 = scmp.ne.s32.totalorder %s35, %s38
      %p44 = scmp.eq.s32.totalorder %s11, 0
      %p45 = por %p43, %p44
      %p46 = scmp.ne.s32.totalorder %s35, %s38
      %p47 = scmp.eq.s32.totalorder %s16, 3
      %p48 = por %p46, %p47
      %p49 = scmp.ne.s32.totalorder %s38, %s39
      %p50 = scmp.eq.s32.totalorder %s16, 0
      %p51 = por %p49, %p50
      %p52 = scmp.ne.s32.totalorder %s38, %s39
      %p53 = scmp.eq.s32.totalorder %s17, 3
      %p54 = por %p52, %p53
      %p56 = scmp.ne.s32.totalorder %s39, %s55
      %p57 = scmp.eq.s32.totalorder %s17, 0
      %p58 = por %p56, %p57
      %s59 = ssub.s32 %s18, %s30
      %s60 = ssub.s32 %s19, %s26
      %s61 = sor.u32 %s59, %s60
      %p62 = scmp.eq.s32.totalorder %s61, 0
      %s64 = sadd.s32 %s63, 1
      %s65 = scalar_select %p62, %s63, %s64
      %p68 = pneg %p62
      %p69 = scmp.eq.s32.totalorder %s11, 3
      %p70 = por %p68, %p69
      %p71 = scmp.ne.s32.totalorder %s63, %s66
      %p72 = scmp.eq.s32.totalorder %s11, 0
      %p73 = por %p71, %p72
      %p74 = scmp.ne.s32.totalorder %s63, %s66
      %p75 = scmp.eq.s32.totalorder %s16, 3
      %p76 = por %p74, %p75
      %p77 = scmp.ne.s32.totalorder %s66, %s67
      %p78 = scmp.eq.s32.totalorder %s16, 0
      %p79 = por %p77, %p78
      %p80 = scmp.ne.s32.totalorder %s66, %s67
      %p81 = scmp.eq.s32.totalorder %s17, 3
      %p82 = por %p80, %p81
      %p84 = scmp.ne.s32.totalorder %s67, %s83
      %p85 = scmp.eq.s32.totalorder %s17, 0
      %p86 = por %p84, %p85
      %s87 = ssub.s32 %s18, %s30
      %s88 = ssub.s32 %s19, %s26
      %s89 = sor.u32 %s87, %s88
      %p90 = scmp.eq.s32.totalorder %s89, 0
      %s92 = sadd.s32 %s91, 1
      %s93 = scalar_select %p90, %s91, %s92
      %p96 = pneg %p90
      %p97 = scmp.eq.s32.totalorder %s11, 3
      %p98 = por %p96, %p97
      %p99 = scmp.ne.s32.totalorder %s91, %s94
      %p100 = scmp.eq.s32.totalorder %s11, 0
      %p101 = por %p99, %p100
      %p102 = scmp.ne.s32.totalorder %s91, %s94
      %p103 = scmp.eq.s32.totalorder %s16, 3
      %p104 = por %p102, %p103
      %p105 = scmp.ne.s32.totalorder %s94, %s95
      %p106 = scmp.eq.s32.totalorder %s16, 0
      %p107 = por %p105, %p106
      %p108 = scmp.ne.s32.totalorder %s94, %s95
      %p109 = scmp.eq.s32.totalorder %s17, 3
      %p110 = por %p108, %p109
      %p112 = scmp.ne.s32.totalorder %s95, %s111
      %p113 = scmp.eq.s32.totalorder %s17, 0
      %p114 = por %p112, %p113
      %s115 = ssub.s32 %s18, %s30
      %p116 = scmp.eq.s32.totalorder %s115, 0
      %s118 = sadd.s32 %s117, 1
      %s119 = scalar_select %p116, %s117, %s118
      %p122 = pneg %p116
      %p123 = scmp.eq.s32.totalorder %s11, 3
      %p124 = por %p122, %p123
      %p125 = scmp.ne.s32.totalorder %s117, %s120
      %p126 = scmp.eq.s32.totalorder %s11, 0
      %p127 = por %p125, %p126
      %p128 = scmp.ne.s32.totalorder %s117, %s120
      %p129 = scmp.eq.s32.totalorder %s16, 3
      %p130 = por %p128, %p129
      %p131 = scmp.ne.s32.totalorder %s120, %s121
      %p132 = scmp.eq.s32.totalorder %s16, 0
      %p133 = por %p131, %p132
      %p134 = scmp.ne.s32.totalorder %s120, %s121
      %p135 = scmp.eq.s32.totalorder %s17, 3
      %p136 = por %p134, %p135
      %p138 = scmp.ne.s32.totalorder %s121, %s137
      %p139 = scmp.eq.s32.totalorder %s17, 0
      %p140 = por %p138, %p139
      %s141 = ssub.s32 %s18, %s30
      %p142 = scmp.eq.s32.totalorder %s141, 0
      %s144 = sadd.s32 %s143, 1
      %s145 = scalar_select %p142, %s143, %s144
      %p148 = pneg %p142
      %p149 = scmp.eq.s32.totalorder %s11, 3
      %p150 = por %p148, %p149
      %p151 = scmp.ne.s32.totalorder %s143, %s146
      %p152 = scmp.eq.s32.totalorder %s11, 0
      %p153 = por %p151, %p152
      %p154 = scmp.ne.s32.totalorder %s143, %s146
      %p155 = scmp.eq.s32.totalorder %s16, 3
      %p156 = por %p154, %p155
      %p157 = scmp.ne.s32.totalorder %s146, %s147
      %p158 = scmp.eq.s32.totalorder %s16, 0
      %p159 = por %p157, %p158
      %p160 = scmp.ne.s32.totalorder %s146, %s147
      %p161 = scmp.eq.s32.totalorder %s17, 3
      %p162 = por %p160, %p161
      %p164 = scmp.ne.s32.totalorder %s147, %s163
      %p165 = scmp.eq.s32.totalorder %s17, 0
      %p166 = por %p164, %p165
      %p167 = scmp.le.s32.totalorder 1, %s11
      %p168 = scmp.lt.s32.totalorder %s11, 5
      %p169 = pnand %p167, %p168
      %p170 = pneg %p169
      // Predicated region
      $region9: #{multilabel_soft_bce_loss.1} parent=5 // pred_check
        _
      $region10: #{multilabel_soft_bce_loss.1} parent=5 // pred_check_branch
        %172 = sbr.rel (%p169) target = $region12
      $region11: #{multilabel_soft_bce_loss.1} parent=5 // pred_region
        %s173 = ssub.s32 %s11, 1
      $region12: #{multilabel_soft_bce_loss.1} parent=5 // pred_fallthru
        _
      %p174 = scmp.lt.s32.totalorder %s11, 4
      // Predicated region
      $region13: #{multilabel_soft_bce_loss.1} parent=5 // pred_check
        %p175 = pneg %p174
      $region14: #{multilabel_soft_bce_loss.1} parent=5 // pred_check_branch
        %177 = sbr.rel (%p175) target = $region16
      $region15: #{multilabel_soft_bce_loss.1} parent=5 // pred_region
        // Predicated region
        $region17: #{multilabel_soft_bce_loss.1} parent=15 // pred_check
          %p178 = pneg %p45
        $region18: #{multilabel_soft_bce_loss.1} parent=15 // pred_check_branch
          %180 = sbr.rel (%p178) target = $region20
        $region19: #{multilabel_soft_bce_loss.1} parent=15 // pred_region
          %s181 = sand.u32 %s35, 1
          %s182 = sand.u32 %s35, 1
          %s183 = smul.addr %s182, 4
          %s184 = scalar_lea.vmem [#allocation4], %s183
          %s185 = smul.addr %s19, 2
          %s186 = smul.addr %s18, 2
          %s187 = sadd.s32 %s185, %s186
          %s188 = scalar_lea.vmem %s0, %s187
          // Predicated region
          $region21: #{multilabel_soft_bce_loss.1} parent=19 // pred_check
            _
          $region22: #{multilabel_soft_bce_loss.1} parent=19 // pred_check_branch
            %190 = sbr.rel (0) target = $region24
          $region23: #{multilabel_soft_bce_loss.1} parent=19 // pred_region
            // Predicated region
            $region25: #{multilabel_soft_bce_loss.1} parent=23 // pred_check
              _
            $region26: #{multilabel_soft_bce_loss.1} parent=23 // pred_check_branch
              %192 = sbr.rel target = $region28
            $region27: #{multilabel_soft_bce_loss.1} parent=23 // pred_region
              // Predicated region
              $region40: #{multilabel_soft_bce_loss.1} parent=27 // pred_check
                _
              $region41: #{multilabel_soft_bce_loss.1} parent=27 // pred_check_branch
                %209 = sbr.rel (0) target = $region43
              $region42: #{multilabel_soft_bce_loss.1} parent=27 // pred_region
                loop: start=0, step=1, limit=1
                $region44: #{multilabel_soft_bce_loss.1} parent=42 // loop_pre_header
                  _
                $region45: #{multilabel_soft_bce_loss.1} parent=42 // loop_header
                  %s212 = sphi 0, %s216
                  %p213 = scmp.ge.s32.totalorder %s212, 1
                  %s217 = sphi %s188, %s188
                  %s218 = sphi %s184, %s184
                $region46: #{multilabel_soft_bce_loss.1} parent=42 // loop_header_branch
                  %215 = sbr.rel (%p213) target = $region50
                $region47: #{multilabel_soft_bce_loss.1} parent=42 // loop_body
                  %v219 = vld [vmem:[%s217] sm:$0x3]
                  %220 = vst [vmem:[%s218] sm:$0x3] %v219
                  %v221 = vld [vmem:[%s217 + $0x8] sm:$0x3]
                  %222 = vst [vmem:[%s218 + $0x2] sm:$0x3] %v221
                $region48: #{multilabel_soft_bce_loss.1} parent=42 // loop_footer
                  %s216 = sadd.s32 1, %s212
                $region49: #{multilabel_soft_bce_loss.1} parent=42 // loop_footer_branch
                  %211 = sbr.rel target = $region45
                $region50: #{multilabel_soft_bce_loss.1} parent=42 // loop_exit
                  _
              $region43: #{multilabel_soft_bce_loss.1} parent=27 // pred_fallthru
                _
            $region28: #{multilabel_soft_bce_loss.1} parent=23 // pred_fallthru
              _
            // Predicated region
            $region29: #{multilabel_soft_bce_loss.1} parent=23 // pred_check
              _
            $region30: #{multilabel_soft_bce_loss.1} parent=23 // pred_check_branch
              %194 = sbr.rel (0) target = $region32
            $region31: #{multilabel_soft_bce_loss.1} parent=23 // pred_region
              loop: start=0, step=1, limit=1
              $region33: #{multilabel_soft_bce_loss.1} parent=31 // loop_pre_header
                _
              $region34: #{multilabel_soft_bce_loss.1} parent=31 // loop_header
                %s197 = sphi 0, %s201
                %p198 = scmp.ge.s32.totalorder %s197, 1
                %s202 = sphi %s188, %s188
                %s203 = sphi %s184, %s184
              $region35: #{multilabel_soft_bce_loss.1} parent=31 // loop_header_branch
                %200 = sbr.rel (%p198) target = $region39
              $region36: #{multilabel_soft_bce_loss.1} parent=31 // loop_body
                %v204 = vld [vmem:[%s202] sm:$0x3]
                %205 = vst [vmem:[%s203] sm:$0x3] %v204
                %v206 = vld [vmem:[%s202 + $0x8] sm:$0x3]
                %207 = vst [vmem:[%s203 + $0x2] sm:$0x3] %v206
              $region37: #{multilabel_soft_bce_loss.1} parent=31 // loop_footer
                %s201 = sadd.s32 1, %s197
              $region38: #{multilabel_soft_bce_loss.1} parent=31 // loop_footer_branch
                %196 = sbr.rel target = $region34
              $region39: #{multilabel_soft_bce_loss.1} parent=31 // loop_exit
                _
            $region32: #{multilabel_soft_bce_loss.1} parent=23 // pred_fallthru
              _
          $region24: #{multilabel_soft_bce_loss.1} parent=19 // pred_fallthru
            _
          %223 = vnop
        $region20: #{multilabel_soft_bce_loss.1} parent=15 // pred_fallthru
          _
        // Predicated region
        $region51: #{multilabel_soft_bce_loss.1} parent=15 // pred_check
          %p224 = pneg %p73
        $region52: #{multilabel_soft_bce_loss.1} parent=15 // pred_check_branch
          %226 = sbr.rel (%p224) target = $region54
        $region53: #{multilabel_soft_bce_loss.1} parent=15 // pred_region
          %s227 = sand.u32 %s63, 1
          %s228 = sand.u32 %s63, 1
          %s229 = smul.addr %s228, 4
          %s230 = scalar_lea.vmem [#allocation5], %s229
          %s231 = smul.addr %s19, 2
          %s232 = smul.addr %s18, 2
          %s233 = sadd.s32 %s231, %s232
          %s234 = scalar_lea.vmem %s1, %s233
          // Predicated region
          $region55: #{multilabel_soft_bce_loss.1} parent=53 // pred_check
            _
          $region56: #{multilabel_soft_bce_loss.1} parent=53 // pred_check_branch
            %236 = sbr.rel (0) target = $region58
          $region57: #{multilabel_soft_bce_loss.1} parent=53 // pred_region
            // Predicated region
            $region59: #{multilabel_soft_bce_loss.1} parent=57 // pred_check
              _
            $region60: #{multilabel_soft_bce_loss.1} parent=57 // pred_check_branch
              %238 = sbr.rel target = $region62
            $region61: #{multilabel_soft_bce_loss.1} parent=57 // pred_region
              // Predicated region
              $region74: #{multilabel_soft_bce_loss.1} parent=61 // pred_check
                _
              $region75: #{multilabel_soft_bce_loss.1} parent=61 // pred_check_branch
                %255 = sbr.rel (0) target = $region77
              $region76: #{multilabel_soft_bce_loss.1} parent=61 // pred_region
                loop: start=0, step=1, limit=1
                $region78: #{multilabel_soft_bce_loss.1} parent=76 // loop_pre_header
                  _
                $region79: #{multilabel_soft_bce_loss.1} parent=76 // loop_header
                  %s258 = sphi 0, %s262
                  %p259 = scmp.ge.s32.totalorder %s258, 1
                  %s263 = sphi %s234, %s234
                  %s264 = sphi %s230, %s230
                $region80: #{multilabel_soft_bce_loss.1} parent=76 // loop_header_branch
                  %261 = sbr.rel (%p259) target = $region84
                $region81: #{multilabel_soft_bce_loss.1} parent=76 // loop_body
                  %v265 = vld [vmem:[%s263] sm:$0x3]
                  %266 = vst [vmem:[%s264] sm:$0x3] %v265
                  %v267 = vld [vmem:[%s263 + $0x8] sm:$0x3]
                  %268 = vst [vmem:[%s264 + $0x2] sm:$0x3] %v267
                $region82: #{multilabel_soft_bce_loss.1} parent=76 // loop_footer
                  %s262 = sadd.s32 1, %s258
                $region83: #{multilabel_soft_bce_loss.1} parent=76 // loop_footer_branch
                  %257 = sbr.rel target = $region79
                $region84: #{multilabel_soft_bce_loss.1} parent=76 // loop_exit
                  _
              $region77: #{multilabel_soft_bce_loss.1} parent=61 // pred_fallthru
                _
            $region62: #{multilabel_soft_bce_loss.1} parent=57 // pred_fallthru
              _
            // Predicated region
            $region63: #{multilabel_soft_bce_loss.1} parent=57 // pred_check
              _
            $region64: #{multilabel_soft_bce_loss.1} parent=57 // pred_check_branch
              %240 = sbr.rel (0) target = $region66
            $region65: #{multilabel_soft_bce_loss.1} parent=57 // pred_region
              loop: start=0, step=1, limit=1
              $region67: #{multilabel_soft_bce_loss.1} parent=65 // loop_pre_header
                _
              $region68: #{multilabel_soft_bce_loss.1} parent=65 // loop_header
                %s243 = sphi 0, %s247
                %p244 = scmp.ge.s32.totalorder %s243, 1
                %s248 = sphi %s234, %s234
                %s249 = sphi %s230, %s230
              $region69: #{multilabel_soft_bce_loss.1} parent=65 // loop_header_branch
                %246 = sbr.rel (%p244) target = $region73
              $region70: #{multilabel_soft_bce_loss.1} parent=65 // loop_body
                %v250 = vld [vmem:[%s248] sm:$0x3]
                %251 = vst [vmem:[%s249] sm:$0x3] %v250
                %v252 = vld [vmem:[%s248 + $0x8] sm:$0x3]
                %253 = vst [vmem:[%s249 + $0x2] sm:$0x3] %v252
              $region71: #{multilabel_soft_bce_loss.1} parent=65 // loop_footer
                %s247 = sadd.s32 1, %s243
              $region72: #{multilabel_soft_bce_loss.1} parent=65 // loop_footer_branch
                %242 = sbr.rel target = $region68
              $region73: #{multilabel_soft_bce_loss.1} parent=65 // loop_exit
                _
            $region66: #{multilabel_soft_bce_loss.1} parent=57 // pred_fallthru
              _
          $region58: #{multilabel_soft_bce_loss.1} parent=53 // pred_fallthru
            _
          %269 = vnop
        $region54: #{multilabel_soft_bce_loss.1} parent=15 // pred_fallthru
          _
      $region16: #{multilabel_soft_bce_loss.1} parent=5 // pred_fallthru
        _
      %p270 = scmp.le.s32.totalorder 1, %s11
      %p271 = scmp.lt.s32.totalorder %s11, 5
      %p272 = pnand %p270, %p271
      %p273 = pneg %p272
      // Predicated region
      $region85: #{multilabel_soft_bce_loss.1} parent=5 // pred_check
        _
      $region86: #{multilabel_soft_bce_loss.1} parent=5 // pred_check_branch
        %275 = sbr.rel (%p272) target = $region88
      $region87: #{multilabel_soft_bce_loss.1} parent=5 // pred_region
        %s276 = ssub.s32 %s11, 1
        %s277 = sand.u32 %s38, 1
        %s278 = sand.u32 %s38, 1
        %s279 = smul.addr %s278, 4
        %s280 = scalar_lea.vmem [#allocation4], %s279
        // Predicated region
        $region89: #{multilabel_soft_bce_loss.1} parent=87 // pred_check
          %p281 = pneg %p51
        $region90: #{multilabel_soft_bce_loss.1} parent=87 // pred_check_branch
          %283 = sbr.rel (%p281) target = $region92
        $region91: #{multilabel_soft_bce_loss.1} parent=87 // pred_region
          _
        $region92: #{multilabel_soft_bce_loss.1} parent=87 // pred_fallthru
          _
        %s284 = sand.u32 %s66, 1
        %s285 = sand.u32 %s66, 1
        %s286 = smul.addr %s285, 4
        %s287 = scalar_lea.vmem [#allocation5], %s286
        // Predicated region
        $region93: #{multilabel_soft_bce_loss.1} parent=87 // pred_check
          %p288 = pneg %p79
        $region94: #{multilabel_soft_bce_loss.1} parent=87 // pred_check_branch
          %290 = sbr.rel (%p288) target = $region96
        $region95: #{multilabel_soft_bce_loss.1} parent=87 // pred_region
          _
        $region96: #{multilabel_soft_bce_loss.1} parent=87 // pred_fallthru
          _
        %s291 = sand.u32 %s38, 1
        %s292 = sand.u32 %s38, 1
        %s293 = smul.addr %s292, 4
        %s294 = scalar_lea.vmem [#allocation4], %s293
        %p295 = pneg %p51
        %p296 = pneg %p48
        %s297 = sand.u32 %s66, 1
        %s298 = sand.u32 %s66, 1
        %s299 = smul.addr %s298, 4
        %s300 = scalar_lea.vmem [#allocation5], %s299
        %p301 = pneg %p79
        %p302 = pneg %p76
        %p303 = pneg %p107
        %p304 = pneg %p104
        %s305 = sand.u32 %s94, 1
        %s306 = sand.u32 %s94, 1
        %s307 = smul.addr %s306, 4
        %s308 = scalar_lea.vmem [#allocation6], %s307
        %p309 = pneg %p133
        %p310 = pneg %p130
        %p311 = scmp.lt.s32.totalorder %s20, 3
        %s312 = scalar_select %p311, %s20, 3
        %s313 = scalar_lea.vmem %s3, %s312
        %p314 = pneg %p159
        %p315 = pneg %p156
        %p316 = scmp.lt.s32.totalorder %s20, 3
        %s317 = scalar_select %p316, %s20, 3
        %s318 = scalar_lea.vmem %s4, %s317
        %p319 = scmp.lt.s32.totalorder %s20, 3
        %s320 = scalar_select %p319, %s20, 3
        %s321 = scalar_lea.vmem %s3, %s320
        %p322 = scmp.lt.s32.totalorder %s20, 3
        %s323 = scalar_select %p322, %s20, 3
        %s324 = scalar_lea.vmem %s4, %s323
        %v325 = vld [vmem:[%s280] sm:$0x3]
        %v326 = vld [vmem:[%s280 + $0x2] sm:$0x3]
        %v327 = vld [vmem:[%s287] sm:$0x3]
        %v328 = vld [vmem:[%s287 + $0x2] sm:$0x3]
        %v329 = vunpack.c.l.bf16 %v327
        %v330 = vunpack.c.l.bf16 %v328
        %v331 = vmax.f32 %v325, 0.0
        %v332 = vmax.f32 %v326, 0.0
        %v336 = vunpack.c.l.s4 1966171168
        %v337 = vunpack.c.0.s8 %v336
        %v338 = vlaneseq
        %v339 = vshrl.u32 %v338, 7
        %v340 = vsub.s32 %v337, %v339
        %v341 = vrot.slane %v329, %v340
        %v343 = vunpack.c.l.s4 1966171168
        %v344 = vunpack.c.0.s8 %v343
        %v345 = vlaneseq
        %v346 = vshrl.u32 %v345, 7
        %v347 = vsub.s32 %v344, %v346
        %v348 = vrot.slane %v330, %v347
        %v351 = vmul.f32 %v325, %v341
        %v352 = vmul.f32 %v326, %v348
        %v353 = vsub.f32 %v331, %v351
        %v354 = vsub.f32 %v332, %v352
        %v355 = vand.u32 2147483647, %v325
        %v356 = vand.u32 2147483647, %v326
        %v357 = vsub.f32 0.0, %v355
        %v358 = vsub.f32 0.0, %v356
        %v359 = vmul.f32 %v357, 1.442695
        %v360 = vpow.pop %v359
        %v361 = vmul.f32 %v358, 1.442695
        %v362 = vpow.pop %v361
        %v363 = vadd.f32 %v360, 1.0
        %v364 = vlog2.pop %v363
        %v365 = vmul.f32 %v364, 0.6931472
        %v366 = vmul.f32 -0.5, %v360
        %v367 = vadd.f32 %v366, 1.0
        %v368 = vmul.f32 %v367, %v360
        %v369 = vand.u32 2147483647, %v360
        %vm370 = vcmp.lt.f32.partialorder %v369, 0.0004427343
        %v371 = vsel %vm370, %v368, %v365
        %v372 = vadd.f32 %v362, 1.0
        %v373 = vlog2.pop %v372
        %v374 = vmul.f32 %v373, 0.6931472
        %v375 = vmul.f32 -0.5, %v362
        %v376 = vadd.f32 %v375, 1.0
        %v377 = vmul.f32 %v376, %v362
        %v378 = vand.u32 2147483647, %v362
        %vm379 = vcmp.lt.f32.partialorder %v378, 0.0004427343
        %v380 = vsel %vm379, %v377, %v374
        %v381 = vadd.f32 %v353, %v371
        %v382 = vadd.f32 %v354, %v380
        %v383 = vsub.f32 1.0, %v329
        %v384 = vsub.f32 1.0, %v330
        %v388 = vunpack.c.l.s4 857870592
        %v389 = vunpack.c.0.s8 %v388
        %v390 = vlaneseq
        %v391 = vshrl.u32 %v390, 7
        %v392 = vsub.s32 %v389, %v391
        %v393 = vrot.slane %v381, %v392
        %v395 = vunpack.c.l.s4 857870592
        %v396 = vunpack.c.0.s8 %v395
        %v397 = vlaneseq
        %v398 = vshrl.u32 %v397, 7
        %v399 = vsub.s32 %v396, %v398
        %v400 = vrot.slane %v382, %v399
        %v403 = vmul.f32 %v383, %v393
        %v404 = vmul.f32 %v384, %v400
        %v408 = vunpack.c.l.s4 1966171168
        %v409 = vunpack.c.0.s8 %v408
        %v410 = vlaneseq
        %v411 = vshrl.u32 %v410, 7
        %v412 = vsub.s32 %v409, %v411
        %v413 = vrot.slane %v403, %v412
        %v415 = vunpack.c.l.s4 1966171168
        %v416 = vunpack.c.0.s8 %v415
        %v417 = vlaneseq
        %v418 = vshrl.u32 %v417, 7
        %v419 = vsub.s32 %v416, %v418
        %v420 = vrot.slane %v404, %v419
        %v423 = vlaneseq
        %vm424 = vcmp.ge.s32.totalorder %v423, 0
        %vm425 = vcmp.lt.s32.totalorder %v423, 256
        %vm426 = vmand %vm424, %vm425
        %427 = vst.msk [vmem:[%s308] sm:$0x3] %vm426, %v413
        %428 = vst.msk [vmem:[%s308 + $0x2] sm:$0x3] %vm426, %v420
        %p429 = scmp.eq.s32.totalorder %s21, 0
        // Predicated region
        $region97: #{multilabel_soft_bce_loss.1} parent=87 // pred_check
          %p430 = pneg %p429
        $region98: #{multilabel_soft_bce_loss.1} parent=87 // pred_check_branch
          %432 = sbr.rel (%p430) target = $region100
        $region99: #{multilabel_soft_bce_loss.1} parent=87 // pred_region
          %vm433 = vcmask 0
          %434 = vst.msk [vmem:[#allocation2] sm:$0x1] %vm433, 0.0
          %435 = vst.msk [vmem:[#allocation3] sm:$0x1] %vm433, 0.0
        $region100: #{multilabel_soft_bce_loss.1} parent=87 // pred_fallthru
          _
        %v436 = vld [vmem:[#allocation2] sm:$0x1]
        %v437 = vlaneseq
        %v438 = vshrl.u32 %v437, 7
        %v439 = vsub.s32 0, %v438
        %v440 = vrot.slane %v329, %v439
        %v441 = vlaneseq
        %v442 = vshrl.u32 %v441, 7
        %v443 = vsub.s32 2, %v442
        %v444 = vrot.slane %v329, %v443
        %v445 = vlaneseq
        %v446 = vshrl.u32 %v445, 7
        %v447 = vsub.s32 0, %v446
        %v448 = vrot.slane %v330, %v447
        %v449 = vlaneseq
        %v450 = vshrl.u32 %v449, 7
        %v451 = vsub.s32 2, %v450
        %v452 = vrot.slane %v330, %v451
        %vm457 = vcmask 1040384
        %v458 = vsel %vm457, %v440, 0.0
        %v459 = vsel %vm457, %v444, 0.0
        %v460 = vadd.f32 %v458, %v459
        %v461 = vsel %vm457, %v448, 0.0
        %v462 = vadd.f32 %v460, %v461
        %v463 = vsel %vm457, %v452, 0.0
        %v464 = vadd.f32 %v462, %v463
        %465 = vadd.xlane.f32.xlu0 %v464
        %v466 = vpop.xlane.xlu0 %465
        %v467 = vrot.slane %v466, 4
        %v468 = vadd.f32 %v466, %v467
        %v469 = vrot.slane %v468, 2
        %v470 = vadd.f32 %v468, %v469
        %v471 = vrot.slane %v470, 1
        %v472 = vadd.f32 %v470, %v471
        %s473 = vtos %v472
        %v474 = vstv %s473
        %v475 = vadd.f32 %v436, %v474
        %vm476 = vcmask 0
        %477 = vst.msk [vmem:[#allocation2] sm:$0x1] %vm476, %v475
        %v478 = vld [vmem:[#allocation3] sm:$0x1]
        %v479 = vmul.f32 %v329, %v393
        %v480 = vmul.f32 %v330, %v400
        %v483 = vlaneseq
        %v484 = vshrl.u32 %v483, 7
        %v485 = vsub.s32 0, %v484
        %v486 = vrot.slane %v479, %v485
        %v487 = vlaneseq
        %v488 = vshrl.u32 %v487, 7
        %v489 = vsub.s32 2, %v488
        %v490 = vrot.slane %v479, %v489
        %v491 = vlaneseq
        %v492 = vshrl.u32 %v491, 7
        %v493 = vsub.s32 0, %v492
        %v494 = vrot.slane %v480, %v493
        %v495 = vlaneseq
        %v496 = vshrl.u32 %v495, 7
        %v497 = vsub.s32 2, %v496
        %v498 = vrot.slane %v480, %v497
        %v503 = vsel %vm457, %v486, 0.0
        %v504 = vsel %vm457, %v490, 0.0
        %v505 = vadd.f32 %v503, %v504
        %v506 = vsel %vm457, %v494, 0.0
        %v507 = vadd.f32 %v505, %v506
        %v508 = vsel %vm457, %v498, 0.0
        %v509 = vadd.f32 %v507, %v508
        %510 = vadd.xlane.f32.xlu0 %v509
        %v511 = vpop.xlane.xlu0 %510
        %v512 = vrot.slane %v511, 4
        %v513 = vadd.f32 %v511, %v512
        %v514 = vrot.slane %v513, 2
        %v515 = vadd.f32 %v513, %v514
        %v516 = vrot.slane %v515, 1
        %v517 = vadd.f32 %v515, %v516
        %s518 = vtos %v517
        %v519 = vstv %s518
        %v520 = vadd.f32 %v478, %v519
        %521 = vst.msk [vmem:[#allocation3] sm:$0x1] %vm476, %v520
        // Predicated region
        $region101: #{multilabel_soft_bce_loss.1} parent=87 // pred_check
          %p522 = pneg %p429
        $region102: #{multilabel_soft_bce_loss.1} parent=87 // pred_check_branch
          %524 = sbr.rel (%p522) target = $region104
        $region103: #{multilabel_soft_bce_loss.1} parent=87 // pred_region
          %v525 = vld [vmem:[#allocation2] sm:$0x1]
          %526 = vst.msk [vmem:[%s321] sm:$0x1] %vm476, %v525
          %v527 = vld [vmem:[#allocation3] sm:$0x1]
          %528 = vst.msk [vmem:[%s324] sm:$0x1] %vm476, %v527
        $region104: #{multilabel_soft_bce_loss.1} parent=87 // pred_fallthru
          _
        %s529 = sand.u32 %s94, 1
        %s530 = sand.u32 %s94, 1
        %s531 = smul.addr %s530, 4
        %s532 = scalar_lea.vmem [#allocation6], %s531
        %p533 = scmp.lt.s32.totalorder %s20, 3
        %s534 = scalar_select %p533, %s20, 3
        %s535 = scalar_lea.vmem %s3, %s534
        %p536 = scmp.lt.s32.totalorder %s20, 3
        %s537 = scalar_select %p536, %s20, 3
        %s538 = scalar_lea.vmem %s4, %s537
        // Predicated region
        $region105: #{multilabel_soft_bce_loss.1} parent=87 // pred_check
          %p539 = pneg %p104
        $region106: #{multilabel_soft_bce_loss.1} parent=87 // pred_check_branch
          %541 = sbr.rel (%p539) target = $region108
        $region107: #{multilabel_soft_bce_loss.1} parent=87 // pred_region
          %s542 = smul.addr %s21, 2
          %s543 = smul.addr %s20, 2
          %s544 = sadd.s32 %s542, %s543
          %s545 = scalar_lea.vmem %s2, %s544
          // Predicated region
          $region109: #{multilabel_soft_bce_loss.1} parent=107 // pred_check
            _
          $region110: #{multilabel_soft_bce_loss.1} parent=107 // pred_check_branch
            %547 = sbr.rel (0) target = $region112
          $region111: #{multilabel_soft_bce_loss.1} parent=107 // pred_region
            // Predicated region
            $region113: #{multilabel_soft_bce_loss.1} parent=111 // pred_check
              _
            $region114: #{multilabel_soft_bce_loss.1} parent=111 // pred_check_branch
              %549 = sbr.rel target = $region116
            $region115: #{multilabel_soft_bce_loss.1} parent=111 // pred_region
              // Predicated region
              $region128: #{multilabel_soft_bce_loss.1} parent=115 // pred_check
                _
              $region129: #{multilabel_soft_bce_loss.1} parent=115 // pred_check_branch
                %566 = sbr.rel (0) target = $region131
              $region130: #{multilabel_soft_bce_loss.1} parent=115 // pred_region
                loop: start=0, step=1, limit=1
                $region132: #{multilabel_soft_bce_loss.1} parent=130 // loop_pre_header
                  _
                $region133: #{multilabel_soft_bce_loss.1} parent=130 // loop_header
                  %s569 = sphi 0, %s573
                  %p570 = scmp.ge.s32.totalorder %s569, 1
                  %s574 = sphi %s532, %s532
                  %s575 = sphi %s545, %s545
                $region134: #{multilabel_soft_bce_loss.1} parent=130 // loop_header_branch
                  %572 = sbr.rel (%p570) target = $region138
                $region135: #{multilabel_soft_bce_loss.1} parent=130 // loop_body
                  %v576 = vld [vmem:[%s574] sm:$0x3]
                  %577 = vst [vmem:[%s575] sm:$0x3] %v576
                  %v578 = vld [vmem:[%s574 + $0x2] sm:$0x3]
                  %579 = vst [vmem:[%s575 + $0x8] sm:$0x3] %v578
                $region136: #{multilabel_soft_bce_loss.1} parent=130 // loop_footer
                  %s573 = sadd.s32 1, %s569
                $region137: #{multilabel_soft_bce_loss.1} parent=130 // loop_footer_branch
                  %568 = sbr.rel target = $region133
                $region138: #{multilabel_soft_bce_loss.1} parent=130 // loop_exit
                  _
              $region131: #{multilabel_soft_bce_loss.1} parent=115 // pred_fallthru
                _
            $region116: #{multilabel_soft_bce_loss.1} parent=111 // pred_fallthru
              _
            // Predicated region
            $region117: #{multilabel_soft_bce_loss.1} parent=111 // pred_check
              _
            $region118: #{multilabel_soft_bce_loss.1} parent=111 // pred_check_branch
              %551 = sbr.rel (0) target = $region120
            $region119: #{multilabel_soft_bce_loss.1} parent=111 // pred_region
              loop: start=0, step=1, limit=1
              $region121: #{multilabel_soft_bce_loss.1} parent=119 // loop_pre_header
                _
              $region122: #{multilabel_soft_bce_loss.1} parent=119 // loop_header
                %s554 = sphi 0, %s558
                %p555 = scmp.ge.s32.totalorder %s554, 1
                %s559 = sphi %s532, %s532
                %s560 = sphi %s545, %s545
              $region123: #{multilabel_soft_bce_loss.1} parent=119 // loop_header_branch
                %557 = sbr.rel (%p555) target = $region127
              $region124: #{multilabel_soft_bce_loss.1} parent=119 // loop_body
                %v561 = vld [vmem:[%s559] sm:$0x3]
                %562 = vst [vmem:[%s560] sm:$0x3] %v561
                %v563 = vld [vmem:[%s559 + $0x2] sm:$0x3]
                %564 = vst [vmem:[%s560 + $0x8] sm:$0x3] %v563
              $region125: #{multilabel_soft_bce_loss.1} parent=119 // loop_footer
                %s558 = sadd.s32 1, %s554
              $region126: #{multilabel_soft_bce_loss.1} parent=119 // loop_footer_branch
                %553 = sbr.rel target = $region122
              $region127: #{multilabel_soft_bce_loss.1} parent=119 // loop_exit
                _
            $region120: #{multilabel_soft_bce_loss.1} parent=111 // pred_fallthru
              _
          $region112: #{multilabel_soft_bce_loss.1} parent=107 // pred_fallthru
            _
          %580 = vnop
        $region108: #{multilabel_soft_bce_loss.1} parent=87 // pred_fallthru
          _
        // Predicated region
        $region139: #{multilabel_soft_bce_loss.1} parent=87 // pred_check
          %p581 = pneg %p130
        $region140: #{multilabel_soft_bce_loss.1} parent=87 // pred_check_branch
          %583 = sbr.rel (%p581) target = $region142
        $region141: #{multilabel_soft_bce_loss.1} parent=87 // pred_region
          _
        $region142: #{multilabel_soft_bce_loss.1} parent=87 // pred_fallthru
          _
        // Predicated region
        $region143: #{multilabel_soft_bce_loss.1} parent=87 // pred_check
          %p584 = pneg %p156
        $region144: #{multilabel_soft_bce_loss.1} parent=87 // pred_check_branch
          %586 = sbr.rel (%p584) target = $region146
        $region145: #{multilabel_soft_bce_loss.1} parent=87 // pred_region
          _
        $region146: #{multilabel_soft_bce_loss.1} parent=87 // pred_fallthru
          _
      $region88: #{multilabel_soft_bce_loss.1} parent=5 // pred_fallthru
        _
      %p587 = scmp.le.s32.totalorder 2, %s11
      // Predicated region
      $region147: #{multilabel_soft_bce_loss.1} parent=5 // pred_check
        %p588 = pneg %p587
      $region148: #{multilabel_soft_bce_loss.1} parent=5 // pred_check_branch
        %590 = sbr.rel (%p588) target = $region150
      $region149: #{multilabel_soft_bce_loss.1} parent=5 // pred_region
        %s591 = ssub.s32 %s11, 2
        // Predicated region
        $region151: #{multilabel_soft_bce_loss.1} parent=149 // pred_check
          %p592 = pneg %p110
        $region152: #{multilabel_soft_bce_loss.1} parent=149 // pred_check_branch
          %594 = sbr.rel (%p592) target = $region154
        $region153: #{multilabel_soft_bce_loss.1} parent=149 // pred_region
          %s595 = sand.u32 %s95, 1
          %s596 = sand.u32 %s95, 1
          %s597 = smul.addr %s596, 4
          %s598 = scalar_lea.vmem [#allocation6], %s597
        $region154: #{multilabel_soft_bce_loss.1} parent=149 // pred_fallthru
          _
        // Predicated region
        $region155: #{multilabel_soft_bce_loss.1} parent=149 // pred_check
          %p599 = pneg %p136
        $region156: #{multilabel_soft_bce_loss.1} parent=149 // pred_check_branch
          %601 = sbr.rel (%p599) target = $region158
        $region157: #{multilabel_soft_bce_loss.1} parent=149 // pred_region
          %p602 = scmp.lt.s32.totalorder %s22, 3
          %s603 = scalar_select %p602, %s22, 3
          %s604 = scalar_lea.vmem %s3, %s603
        $region158: #{multilabel_soft_bce_loss.1} parent=149 // pred_fallthru
          _
        // Predicated region
        $region159: #{multilabel_soft_bce_loss.1} parent=149 // pred_check
          %p605 = pneg %p162
        $region160: #{multilabel_soft_bce_loss.1} parent=149 // pred_check_branch
          %607 = sbr.rel (%p605) target = $region162
        $region161: #{multilabel_soft_bce_loss.1} parent=149 // pred_region
          %p608 = scmp.lt.s32.totalorder %s22, 3
          %s609 = scalar_select %p608, %s22, 3
          %s610 = scalar_lea.vmem %s4, %s609
        $region162: #{multilabel_soft_bce_loss.1} parent=149 // pred_fallthru
          _
      $region150: #{multilabel_soft_bce_loss.1} parent=5 // pred_fallthru
        _
    $region6: #{multilabel_soft_bce_loss.1} parent=1 // loop_footer
      %s15 = sadd.s32 1, %s11
    $region7: #{multilabel_soft_bce_loss.1} parent=1 // loop_footer_branch
      %10 = sbr.rel target = $region3
    $region8: #{multilabel_soft_bce_loss.1} parent=1 // loop_exit
      _

</llo_original>
